<compile_context>
chip_gen: v5e
topology: v5e:2x2
jax: 0.10.0
libtpu: 0.0.40
codegen_flags: <defaults>
</compile_context>

<pallas_src>
import jax
import jax.numpy as jnp
from jax.experimental import pallas as pl
from jax.experimental.pallas import tpu as pltpu


def _round_up(n, m):
    return ((n + m - 1) // m) * m


def _sublane_pack(dtype):
    """Rows per packed sublane group for this dtype: 8 f32, 16 bf16, 32 int8."""
    return max(8, 32 // jnp.dtype(dtype).itemsize)


def _vmem_capacity_bytes():
    try:
        return int(pltpu.get_tpu_info().vmem_capacity_bytes)
    except Exception:
        return 64 * 1024 * 1024  # conservative: v7x per-TensorCore VMEM


def _pick_bn(out_features, block_n):
    """Out-dim tile: full out, or a multiple of 128 that divides it."""
    if out_features <= block_n or out_features % 128 != 0:
        return out_features
    bn = (block_n // 128) * 128
    while bn >= 128:
        if out_features % bn == 0:
            return bn
        bn -= 128
    return out_features


# ----------------------------- kernels --------------------------------------

def _lora_kernel(x_ref, a_ref, b_ref, o_ref):
    # x_ref: (tm, in)   a_ref: (in, r) [scaling pre-folded]   b_ref: (r, bn)
    tmp = jnp.dot(x_ref[...], a_ref[...], preferred_element_type=jnp.float32)
    out = jnp.dot(tmp.astype(b_ref.dtype), b_ref[...],
                  preferred_element_type=jnp.float32)
    o_ref[...] = out.astype(o_ref.dtype)


def _lora_kernel_bias(x_ref, a_ref, b_ref, bias_ref, o_ref):
    tmp = jnp.dot(x_ref[...], a_ref[...], preferred_element_type=jnp.float32)
    out = jnp.dot(tmp.astype(b_ref.dtype), b_ref[...],
                  preferred_element_type=jnp.float32)
    out = out + bias_ref[...].astype(jnp.float32)
    o_ref[...] = out.astype(o_ref.dtype)


# ----------------------------- wrappers --------------------------------------

def prepare_lora_weights(lora_A, lora_B, bias, scaling, dtype):
    """One-off O(in*r + out*r) prep; hoist out of the per-step hot path
    (adapter load time), not per forward call."""
    a_t = (jnp.transpose(lora_A).astype(jnp.float32) * float(scaling)).astype(dtype)
    b_t = jnp.transpose(lora_B).astype(dtype)                    # (r, out)
    bias2d = None if bias is None else bias.reshape(1, -1).astype(dtype)
    return a_t, b_t, bias2d


def lora_linear_apply(x, a_t, b_t, bias2d, *, block_m=512, block_n=2048):
    """x: (..., in) -> (..., out). a_t: (in, r) with scaling folded in,
    b_t: (r, out), bias2d: (1, out) or None."""
    in_features, r = a_t.shape
    out_features = b_t.shape[1]
    leading = x.shape[:-1]
    dtype = x.dtype
    bytes_el = jnp.dtype(dtype).itemsize

    x2d = x.reshape(-1, in_features)
    M = x2d.shape[0]

    bn = _pick_bn(out_features, block_n)
    sub = _sublane_pack(dtype)

    # ---- tm from per-generation VMEM budget ---------------------------------
    vmem_cap = _vmem_capacity_bytes()
    budget = int(vmem_cap * 0.75)
    per_row = 2 * (in_features + bn) * bytes_el            # double-buffered x + y
    resident = 2 * (in_features * r + r * bn + bn) * bytes_el
    tm_max = max(sub, (budget - resident) // max(per_row, 1))

    if M <= sub:
        tm = M                                             # block == full dim
    else:
        tm = min(block_m, tm_max)
        tm = max(sub, (tm // sub) * sub)
        # Keep >= 2 grid steps along M so v7x's two TensorCores both get work.
        half_m = _round_up(pl.cdiv(M, 2), sub)
        tm = min(tm, max(sub, half_m))
        tm = min(tm, _round_up(M, sub))

    grid = (pl.cdiv(M, tm), out_features // bn)

    # Explicit scoped-VMEM limit from the actual tile footprint (+~25%).
    footprint = tm * per_row + resident
    vmem_limit = min(vmem_cap,
                     max(16 * 1024 * 1024, int(footprint * 1.25) + (2 << 20)))

    flops = 2 * M * r * (in_features + out_features)
    bytes_accessed = bytes_el * (M * in_features + M * out_features
                                 + in_features * r + r * out_features
                                 + out_features)
    cost = pl.CostEstimate(flops=flops, transcendentals=0,
                           bytes_accessed=bytes_accessed)

    in_specs = [
        pl.BlockSpec((tm, in_features), lambda i, j: (i, 0)),   # streamed x
        pl.BlockSpec((in_features, r), lambda i, j: (0, 0)),    # resident A^T*s
        pl.BlockSpec((r, bn), lambda i, j: (0, j)),             # B^T tile
    ]
    operands = [x2d, a_t, b_t]
    kernel = _lora_kernel
    if bias2d is not None:
        in_specs.append(pl.BlockSpec((1, bn), lambda i, j: (0, j)))
        operands.append(bias2d)
        kernel = _lora_kernel_bias

    y2d = pl.pallas_call(
        kernel,
        out_shape=jax.ShapeDtypeStruct((M, out_features), dtype),
        grid=grid,
        in_specs=in_specs,
        out_specs=pl.BlockSpec((tm, bn), lambda i, j: (i, j)),
        compiler_params=pltpu.CompilerParams(
            dimension_semantics=("parallel", "parallel"),
            vmem_limit_bytes=int(vmem_limit),
        ),
        cost_estimate=cost,
    )(*operands)

    return y2d.reshape(*leading, out_features)


def lora_linear_forward(x, lora_A, lora_B, bias, *, scaling,
                        block_m=512, block_n=2048):
    """Convenience wrapper matching LoRALinear.forward semantics.
    lora_A: (r, in), lora_B: (out, r), bias: (out,) or None."""
    a_t, b_t, bias2d = prepare_lora_weights(lora_A, lora_B, bias, scaling, x.dtype)
    return lora_linear_apply(x, a_t, b_t, bias2d, block_m=block_m, block_n=block_n)


if __name__ == "__main__":
    # Module hyper-params (small, consistent with an nn.Linear(in, out) target).
    in_features = 32
    out_features = 16
    r = 4
    lora_alpha = 8
    scaling = lora_alpha / r

    batch, seq = 2, 8

    key = jax.random.PRNGKey(0)
    kx, ka, kb, kbias = jax.random.split(key, 4)

    x = jax.random.normal(kx, (batch, seq, in_features), dtype=jnp.float32)
    # Faithful init has lora_B = zeros (output == bias); use random values so
    # the kernel's matmul path is actually exercised.
    lora_A = jax.random.normal(ka, (r, in_features), dtype=jnp.float32) * 0.1
    lora_B = jax.random.normal(kb, (out_features, r), dtype=jnp.float32) * 0.1
    bias = jax.random.normal(kbias, (out_features,), dtype=jnp.float32) * 0.1

    y = lora_linear_forward(x, lora_A, lora_B, bias, scaling=scaling)
    y = jax.block_until_ready(y)

    # Pure-JAX reference matching PyTorch semantics exactly.
    w_eff = (lora_B @ lora_A) * scaling                       # (out, in)
    y_ref = jnp.einsum("bsi,oi->bso", x, w_eff) + bias        # F.linear

    assert y.shape == (batch, seq, out_features)
    assert jnp.allclose(y, y_ref, atol=1e-5, rtol=1e-5), "mismatch vs reference"

    print("KERNEL_OK")
</pallas_src>

<mosaic_0001>
module attributes {stable_mosaic.version = 11 : i64} {
  func.func @_lora_kernel_bias(%arg0: i32, %arg1: i32, %arg2: memref<8x32xf32, #tpu.memory_space<vmem>>, %arg3: memref<32x4xf32, #tpu.memory_space<vmem>>, %arg4: memref<4x16xf32, #tpu.memory_space<vmem>>, %arg5: memref<1x16xf32, #tpu.memory_space<vmem>>, %arg6: memref<8x16xf32, #tpu.memory_space<vmem>>) attributes {dimension_semantics = [#tpu.dimension_semantics<parallel>, #tpu.dimension_semantics<parallel>], iteration_bounds = array<i64: 2, 1>, scalar_prefetch = 0 : i64, scratch_operands = 0 : i64, tpu.core_type = #tpu.core_type<tc>, window_params = [{transform_indices = @transform_0, window_bounds = array<i64: 8, 32>}, {pipeline_mode = #tpu.pipeline_mode<synchronous>, transform_indices = @transform_1, window_bounds = array<i64: 32, 4>}, {transform_indices = @transform_2, window_bounds = array<i64: 4, 16>}, {transform_indices = @transform_3, window_bounds = array<i64: 1, 16>}, {transform_indices = @transform_4, window_bounds = array<i64: 8, 16>}]} {
    %c0 = arith.constant 0 : index
    %c0_0 = arith.constant 0 : index
    %0 = vector.load %arg2[%c0, %c0_0] : memref<8x32xf32, #tpu.memory_space<vmem>>, vector<8x32xf32>
    %c0_1 = arith.constant 0 : index
    %c0_2 = arith.constant 0 : index
    %1 = vector.load %arg3[%c0_1, %c0_2] : memref<32x4xf32, #tpu.memory_space<vmem>>, vector<32x4xf32>
    %cst = arith.constant dense<0.000000e+00> : vector<8x4xf32>
    %2 = tpu.matmul %0, %1, %cst {dimension_numbers = #tpu.dot_dimension_numbers<[1], [0], [0], [1], [0, 0, 1, 1], [], []>} : vector<8x32xf32>, vector<32x4xf32>, vector<8x4xf32> -> vector<8x4xf32>
    %c0_3 = arith.constant 0 : index
    %c0_4 = arith.constant 0 : index
    %3 = vector.load %arg4[%c0_3, %c0_4] : memref<4x16xf32, #tpu.memory_space<vmem>>, vector<4x16xf32>
    %cst_5 = arith.constant dense<0.000000e+00> : vector<8x16xf32>
    %4 = tpu.matmul %2, %3, %cst_5 {dimension_numbers = #tpu.dot_dimension_numbers<[1], [0], [0], [1], [0, 0, 1, 1], [], []>} : vector<8x4xf32>, vector<4x16xf32>, vector<8x16xf32> -> vector<8x16xf32>
    %c0_6 = arith.constant 0 : index
    %c0_7 = arith.constant 0 : index
    %5 = vector.load %arg5[%c0_6, %c0_7] : memref<1x16xf32, #tpu.memory_space<vmem>>, vector<1x16xf32>
    %6 = vector.broadcast %5 : vector<1x16xf32> to vector<8x16xf32>
    %7 = arith.addf %4, %6 : vector<8x16xf32>
    %c0_8 = arith.constant 0 : index
    %c0_9 = arith.constant 0 : index
    %8 = vector.load %arg6[%c0_8, %c0_9] : memref<8x16xf32, #tpu.memory_space<vmem>>, vector<8x16xf32>
    tpu.vector_store %arg6[%c0_8, %c0_9], %7 {strides = array<i32>} : memref<8x16xf32, #tpu.memory_space<vmem>>, vector<8x16xf32>,
    return
  }
  func.func @transform_0(%arg0: i32, %arg1: i32) -> (i32, i32) {
    %c0_i32 = arith.constant 0 : i32
    %c0_i32_0 = arith.constant 0 : i32
    return %arg0, %c0_i32 : i32, i32
  }
  func.func @transform_1(%arg0: i32, %arg1: i32) -> (i32, i32) {
    %c0_i32 = arith.constant 0 : i32
    %c0_i32_0 = arith.constant 0 : i32
    %c0_i32_1 = arith.constant 0 : i32
    return %c0_i32, %c0_i32_0 : i32, i32
  }
  func.func @transform_2(%arg0: i32, %arg1: i32) -> (i32, i32) {
    %c0_i32 = arith.constant 0 : i32
    %c0_i32_0 = arith.constant 0 : i32
    return %c0_i32, %arg1 : i32, i32
  }
  func.func @transform_3(%arg0: i32, %arg1: i32) -> (i32, i32) {
    %c0_i32 = arith.constant 0 : i32
    %c0_i32_0 = arith.constant 0 : i32
    return %c0_i32, %arg1 : i32, i32
  }
  func.func @transform_4(%arg0: i32, %arg1: i32) -> (i32, i32) {
    %c0_i32 = arith.constant 0 : i32
    return %arg0, %arg1 : i32, i32
  }
}

</mosaic_0001>

<llo_original>
// kernel: tpu_custom_call.1
$region0: #{tpu_custom_call.1}
  #allocation0 [shape = 'u32[]', space=smem, size = 0x4, offset = 0x4, fixed_abs, tag = 'smem constant byte address 0x4 - core index']
  #allocation1 [shape = 'u32[72,128]{1,0:T(1,128)}', space=vmem, size = 0x9000, scoped, tag = 'internal scratch']
  %s0 = inlined_call_operand.vmem [shape: f32[16,32], index: 0, kind: input, shape index: {}]
  %s1 = inlined_call_operand.vmem [shape: f32[32,4], index: 1, kind: input, shape index: {}]
  %s2 = inlined_call_operand.vmem [shape: f32[4,16], index: 2, kind: input, shape index: {}]
  %s3 = inlined_call_operand.vmem [shape: f32[1,16], index: 3, kind: input, shape index: {}]
  %s4 = inlined_call_operand.hbm [shape: f32[16,16], index: 4, kind: output, shape index: {}]
  %s5 = sld [smem:[#allocation0]]
  $region49: #{tpu_custom_call.1} parent=0
    _
  %s7 = ssub.s32 1, %s5
  %s8 = scalar_select 0, %s7, %s5
  $region1: #{tpu_custom_call.1} parent=0
    #allocation2 [shape = 'u8[8192]{0}', space=vmem, size = 0x2000, scoped, tag = 'output window, operand 0']
    #allocation3 [shape = 's32[2]{0}', space=sflag, size = 0x8, scoped, tag = 'scoped memory for tpu_custom_call.1']
    %9 = vsyncpa [#allocation3], 0
    %s10 = scalar_lea.sflag [#allocation3], 1
    %11 = vsyncpa %s10, 0
    loop: start=0, step=1, limit=4
    $region2: #{tpu_custom_call.1} parent=1 // loop_pre_header
      _
    $region3: #{tpu_custom_call.1} parent=1 // loop_header
      %s13 = sphi 0, %s17
      %p14 = scmp.ge.s32.totalorder %s13, 4
      %s20 = sphi 0, %s32
      %s21 = sphi 0, %s28
      %s22 = sphi 0, %s20
      %s23 = sphi 0, %s21
      %s24 = sphi 0, %s22
      %s25 = sphi 0, %s23
      %s35 = sphi 0, %s37
      %s38 = sphi 0, %s35
      %s39 = sphi 0, %s38
      %s55 = sphi 0, %s39
      %s59 = sphi 0, %s59
      %s61 = sphi 0, %s59
      %s62 = sphi 0, %s61
      %s76 = sphi 0, %s62
      %s82 = sphi 0, %s84
      %s85 = sphi 0, %s82
      %s86 = sphi 0, %s85
      %s102 = sphi 0, %s86
      %s108 = sphi 0, %s110
      %s111 = sphi 0, %s108
      %s112 = sphi 0, %s111
      %s128 = sphi 0, %s112
      %s136 = sphi 0, %s138
      %s139 = sphi 0, %s136
      %s140 = sphi 0, %s139
      %s156 = sphi 0, %s140
    $region4: #{tpu_custom_call.1} parent=1 // loop_header_branch
      %16 = sbr.rel (%p14) target = $region8
    $region5: #{tpu_custom_call.1} parent=1 // loop_body
      %s18 = ssub.s32 %s13, 1
      %s19 = ssub.s32 %s13, 2
      %s26 = sadd.s32 1, %s21
      %p27 = scmp.ge.s32.totalorder %s26, 1
      %s28 = scalar_select %p27, 0, %s26
      %s29 = sadd.s32 1, %s20
      %s30 = scalar_select %p27, %s29, %s20
      %p31 = scmp.ge.s32.totalorder %s30, 2
      %s32 = scalar_select %p31, 0, %s30
      %s33 = ssub.s32 %s20, %s32
      %p34 = scmp.eq.s32.totalorder %s33, 0
      %s36 = sadd.s32 %s35, 1
      %s37 = scalar_select %p34, %s35, %s36
      %p40 = pneg %p34
      %p41 = scmp.eq.s32.totalorder %s13, 1
      %p42 = por %p40, %p41
      %p43 = scmp.ne.s32.totalorder %s35, %s38
      %p44 = scmp.eq.s32.totalorder %s13, 0
      %p45 = por %p43, %p44
      %p46 = scmp.ne.s32.totalorder %s35, %s38
      %p47 = scmp.eq.s32.totalorder %s18, 1
      %p48 = por %p46, %p47
      %p49 = scmp.ne.s32.totalorder %s38, %s39
      %p50 = scmp.eq.s32.totalorder %s18, 0
      %p51 = por %p49, %p50
      %p52 = scmp.ne.s32.totalorder %s38, %s39
      %p53 = scmp.eq.s32.totalorder %s19, 1
      %p54 = por %p52, %p53
      %p56 = scmp.ne.s32.totalorder %s39, %s55
      %p57 = scmp.eq.s32.totalorder %s19, 0
      %p58 = por %p56, %p57
      %s60 = sadd.s32 %s59, 1
      %p63 = scmp.eq.s32.totalorder %s13, 1
      %p64 = scmp.ne.s32.totalorder %s59, %s61
      %p65 = scmp.eq.s32.totalorder %s13, 0
      %p66 = por %p64, %p65
      %p67 = scmp.ne.s32.totalorder %s59, %s61
      %p68 = scmp.eq.s32.totalorder %s18, 1
      %p69 = por %p67, %p68
      %p70 = scmp.ne.s32.totalorder %s61, %s62
      %p71 = scmp.eq.s32.totalorder %s18, 0
      %p72 = por %p70, %p71
      %p73 = scmp.ne.s32.totalorder %s61, %s62
      %p74 = scmp.eq.s32.totalorder %s19, 1
      %p75 = por %p73, %p74
      %p77 = scmp.ne.s32.totalorder %s62, %s76
      %p78 = scmp.eq.s32.totalorder %s19, 0
      %p79 = por %p77, %p78
      %s80 = ssub.s32 %s21, %s28
      %p81 = scmp.eq.s32.totalorder %s80, 0
      %s83 = sadd.s32 %s82, 1
      %s84 = scalar_select %p81, %s82, %s83
      %p87 = pneg %p81
      %p88 = scmp.eq.s32.totalorder %s13, 1
      %p89 = por %p87, %p88
      %p90 = scmp.ne.s32.totalorder %s82, %s85
      %p91 = scmp.eq.s32.totalorder %s13, 0
      %p92 = por %p90, %p91
      %p93 = scmp.ne.s32.totalorder %s82, %s85
      %p94 = scmp.eq.s32.totalorder %s18, 1
      %p95 = por %p93, %p94
      %p96 = scmp.ne.s32.totalorder %s85, %s86
      %p97 = scmp.eq.s32.totalorder %s18, 0
      %p98 = por %p96, %p97
      %p99 = scmp.ne.s32.totalorder %s85, %s86
      %p100 = scmp.eq.s32.totalorder %s19, 1
      %p101 = por %p99, %p100
      %p103 = scmp.ne.s32.totalorder %s86, %s102
      %p104 = scmp.eq.s32.totalorder %s19, 0
      %p105 = por %p103, %p104
      %s106 = ssub.s32 %s21, %s28
      %p107 = scmp.eq.s32.totalorder %s106, 0
      %s109 = sadd.s32 %s108, 1
      %s110 = scalar_select %p107, %s108, %s109
      %p113 = pneg %p107
      %p114 = scmp.eq.s32.totalorder %s13, 1
      %p115 = por %p113, %p114
      %p116 = scmp.ne.s32.totalorder %s108, %s111
      %p117 = scmp.eq.s32.totalorder %s13, 0
      %p118 = por %p116, %p117
      %p119 = scmp.ne.s32.totalorder %s108, %s111
      %p120 = scmp.eq.s32.totalorder %s18, 1
      %p121 = por %p119, %p120
      %p122 = scmp.ne.s32.totalorder %s111, %s112
      %p123 = scmp.eq.s32.totalorder %s18, 0
      %p124 = por %p122, %p123
      %p125 = scmp.ne.s32.totalorder %s111, %s112
      %p126 = scmp.eq.s32.totalorder %s19, 1
      %p127 = por %p125, %p126
      %p129 = scmp.ne.s32.totalorder %s112, %s128
      %p130 = scmp.eq.s32.totalorder %s19, 0
      %p131 = por %p129, %p130
      %s132 = ssub.s32 %s20, %s32
      %s133 = ssub.s32 %s21, %s28
      %s134 = sor.u32 %s132, %s133
      %p135 = scmp.eq.s32.totalorder %s134, 0
      %s137 = sadd.s32 %s136, 1
      %s138 = scalar_select %p135, %s136, %s137
      %p141 = pneg %p135
      %p142 = scmp.eq.s32.totalorder %s13, 1
      %p143 = por %p141, %p142
      %p144 = scmp.ne.s32.totalorder %s136, %s139
      %p145 = scmp.eq.s32.totalorder %s13, 0
      %p146 = por %p144, %p145
      %p147 = scmp.ne.s32.totalorder %s136, %s139
      %p148 = scmp.eq.s32.totalorder %s18, 1
      %p149 = por %p147, %p148
      %p150 = scmp.ne.s32.totalorder %s139, %s140
      %p151 = scmp.eq.s32.totalorder %s18, 0
      %p152 = por %p150, %p151
      %p153 = scmp.ne.s32.totalorder %s139, %s140
      %p154 = scmp.eq.s32.totalorder %s19, 1
      %p155 = por %p153, %p154
      %p157 = scmp.ne.s32.totalorder %s140, %s156
      %p158 = scmp.eq.s32.totalorder %s19, 0
      %p159 = por %p157, %p158
      %p160 = scmp.le.s32.totalorder 1, %s13
      %p161 = scmp.lt.s32.totalorder %s13, 3
      %p162 = pnand %p160, %p161
      %p163 = pneg %p162
      // Predicated region
      $region9: #{tpu_custom_call.1} parent=5 // pred_check
        _
      $region10: #{tpu_custom_call.1} parent=5 // pred_check_branch
        %165 = sbr.rel (%p162) target = $region12
      $region11: #{tpu_custom_call.1} parent=5 // pred_region
        %s166 = ssub.s32 %s13, 1
        // Predicated region
        $region13: #{tpu_custom_call.1} parent=11 // pred_check
          %p167 = pneg %p72
        $region14: #{tpu_custom_call.1} parent=11 // pred_check_branch
          %169 = sbr.rel (%p167) target = $region16
        $region15: #{tpu_custom_call.1} parent=11 // pred_region
          _
        $region16: #{tpu_custom_call.1} parent=11 // pred_fallthru
          _
        // Predicated region
        $region17: #{tpu_custom_call.1} parent=11 // pred_check
          %p170 = pneg %p98
        $region18: #{tpu_custom_call.1} parent=11 // pred_check_branch
          %172 = sbr.rel (%p170) target = $region20
        $region19: #{tpu_custom_call.1} parent=11 // pred_region
          %p173 = scmp.lt.s32.totalorder %s23, 0
          %s174 = scalar_select %p173, %s23, 0
          %s175 = smul.addr %s174, 4
          %s176 = scalar_lea.vmem %s2, %s175
        $region20: #{tpu_custom_call.1} parent=11 // pred_fallthru
          _
        // Predicated region
        $region21: #{tpu_custom_call.1} parent=11 // pred_check
          %p177 = pneg %p124
        $region22: #{tpu_custom_call.1} parent=11 // pred_check_branch
          %179 = sbr.rel (%p177) target = $region24
        $region23: #{tpu_custom_call.1} parent=11 // pred_region
          %p180 = scmp.lt.s32.totalorder %s23, 0
          %s181 = scalar_select %p180, %s23, 0
          %s182 = scalar_lea.vmem %s3, %s181
        $region24: #{tpu_custom_call.1} parent=11 // pred_fallthru
          _
      $region12: #{tpu_custom_call.1} parent=5 // pred_fallthru
        _
      %p183 = scmp.lt.s32.totalorder %s13, 2
      // Predicated region
      $region25: #{tpu_custom_call.1} parent=5 // pred_check
        %p184 = pneg %p183
      $region26: #{tpu_custom_call.1} parent=5 // pred_check_branch
        %186 = sbr.rel (%p184) target = $region28
      $region27: #{tpu_custom_call.1} parent=5 // pred_region
        // Predicated region
        $region29: #{tpu_custom_call.1} parent=27 // pred_check
          %p187 = pneg %p45
        $region30: #{tpu_custom_call.1} parent=27 // pred_check_branch
          %189 = sbr.rel (%p187) target = $region32
        $region31: #{tpu_custom_call.1} parent=27 // pred_region
          %p190 = scmp.lt.s32.totalorder %s20, 1
          %s191 = scalar_select %p190, %s20, 1
          %s192 = smul.addr %s191, 8
          %s193 = scalar_lea.vmem %s0, %s192
        $region32: #{tpu_custom_call.1} parent=27 // pred_fallthru
          _
      $region28: #{tpu_custom_call.1} parent=5 // pred_fallthru
        _
      %p194 = scmp.le.s32.totalorder 1, %s13
      %p195 = scmp.lt.s32.totalorder %s13, 3
      %p196 = pnand %p194, %p195
      %p197 = pneg %p196
      // Predicated region
      $region33: #{tpu_custom_call.1} parent=5 // pred_check
        _
      $region34: #{tpu_custom_call.1} parent=5 // pred_check_branch
        %199 = sbr.rel (%p196) target = $region36
      $region35: #{tpu_custom_call.1} parent=5 // pred_region
        %s200 = ssub.s32 %s13, 1
        %p201 = scmp.lt.s32.totalorder %s22, 1
        %s202 = scalar_select %p201, %s22, 1
        %s203 = smul.addr %s202, 8
        %s204 = scalar_lea.vmem %s0, %s203
        %p205 = pneg %p51
        %p206 = pneg %p48
        %p207 = pneg %p72
        %p208 = pneg %p69
        %p209 = scmp.lt.s32.totalorder %s23, 0
        %s210 = scalar_select %p209, %s23, 0
        %s211 = smul.addr %s210, 4
        %s212 = scalar_lea.vmem %s2, %s211
        %p213 = pneg %p98
        %p214 = pneg %p95
        %p215 = scmp.lt.s32.totalorder %s23, 0
        %s216 = scalar_select %p215, %s23, 0
        %s217 = scalar_lea.vmem %s3, %s216
        %p218 = pneg %p124
        %p219 = pneg %p121
        %p220 = pneg %p152
        %p221 = pneg %p149
        %s222 = sand.u32 %s139, 1
        %s223 = scalar_lea.sflag [#allocation3], %s222
        %s224 = sand.u32 %s139, 1
        %s225 = smul.addr %s224, 8
        %s226 = scalar_lea.vmem [#allocation2], %s225
        %p227 = scmp.lt.s32.totalorder %s22, 1
        %s228 = scalar_select %p227, %s22, 1
        %s229 = smul.addr %s228, 8
        %s230 = scalar_lea.vmem %s0, %s229
        %p231 = scmp.lt.s32.totalorder %s23, 0
        %s232 = scalar_select %p231, %s23, 0
        %s233 = smul.addr %s232, 4
        %s234 = scalar_lea.vmem %s2, %s233
        %p235 = scmp.lt.s32.totalorder %s23, 0
        %s236 = scalar_select %p235, %s23, 0
        %s237 = scalar_lea.vmem %s3, %s236
        %v238 = vld [vmem:[%s230] sm:$0xff]
        %v239 = vld [vmem:[%s1] sm:$0xff]
        %v240 = vld [vmem:[%s1 + $0x8] sm:$0xff]
        %v241 = vld [vmem:[%s1 + $0x10] sm:$0xff]
        %v242 = vld [vmem:[%s1 + $0x18] sm:$0xff]
        %vm243 = vcmask 261120
        %v245 = vsel %vm243, %v238, 0
        %247 = vmatpush.msra.mxu0 0.0
        %248 = vmatpush.msra.mxu0 0.0
        %249 = vmatpush.msra.mxu0 0.0
        %250 = vmatpush.msra.mxu0 0.0
        %251 = vmatpush.msra.mxu0 0.0
        %252 = vmatpush.msra.mxu0 0.0
        %253 = vmatpush.msra.mxu0 0.0
        %254 = vmatpush.msra.mxu0 0.0
        %255 = vmatpush.msra.mxu0 0.0
        %256 = vmatpush.msra.mxu0 0.0
        %257 = vmatpush.msra.mxu0 0.0
        %258 = vmatpush.msra.mxu0 0.0
        %259 = vmatpush.msra.mxu0 %v242
        %260 = vmatpush.msra.mxu0 %v241
        %261 = vmatpush.msra.mxu0 %v240
        %262 = vmatpush.msra.mxu0 %v239
        %263 = vmatmul.f32.gmra.mxu0 %v245
        %v264 = vpop.f32.mrf.mxu0
        %v265 = vadd.f32 0.0, %v264
        %266 = vdwg.mxu0
        %v267 = vld [vmem:[%s234] sm:$0xf]
        %v268 = vld [vmem:[%s237] sm:$0x1]
        %v270 = vperm.slane %v268, 0
        %vm272 = vcmask 31744
        %v274 = vsel %vm272, %v265, 0
        %vm276 = vcmask 1043456
        %v278 = vsel %vm276, %v267, 0
        %280 = vmatpush.msra.mxu0 0.0
        %281 = vmatpush.msra.mxu0 0.0
        %282 = vmatpush.msra.mxu0 0.0
        %283 = vmatpush.msra.mxu0 0.0
        %284 = vmatpush.msra.mxu0 0.0
        %285 = vmatpush.msra.mxu0 0.0
        %286 = vmatpush.msra.mxu0 0.0
        %287 = vmatpush.msra.mxu0 0.0
        %288 = vmatpush.msra.mxu0 0.0
        %289 = vmatpush.msra.mxu0 0.0
        %290 = vmatpush.msra.mxu0 0.0
        %291 = vmatpush.msra.mxu0 0.0
        %292 = vmatpush.msra.mxu0 0.0
        %293 = vmatpush.msra.mxu0 0.0
        %294 = vmatpush.msra.mxu0 0.0
        %295 = vmatpush.msra.mxu0 %v278
        %296 = vmatmul.f32.gmra.mxu0 %v274
        %v297 = vpop.f32.mrf.mxu0
        %v298 = vadd.f32 %v270, %v297
        %299 = vdwg.mxu0
        %vm300 = vcmask 130048
        %301 = vst.msk [vmem:[%s226] sm:$0xff] %vm300, %v298
        %s302 = sand.u32 %s139, 1
        %s303 = scalar_lea.sflag [#allocation3], %s302
        %s304 = sand.u32 %s139, 1
        %s305 = smul.addr %s304, 8
        %s306 = scalar_lea.vmem [#allocation2], %s305
        // Predicated region
        $region37: #{tpu_custom_call.1} parent=35 // pred_check
          %p307 = pneg %p149
        $region38: #{tpu_custom_call.1} parent=35 // pred_check_branch
          %309 = sbr.rel (%p307) target = $region40
        $region39: #{tpu_custom_call.1} parent=35 // pred_region
          %311 = vsyncadd %s303, 0
          %s312 = sadd.s32 %s23, %s22
          %s313 = smul.addr %s312, 8
          %s314 = scalar_lea.hbm %s4, %s313
          %s316 = sshll.u32 %s306, 4
          %s317 = int_to_ptr.vmem [resolvable:$true] %s316
          %s318 = sshll.u32 %s314, 4
          %s319 = int_to_ptr.hbm [resolvable:$true] %s318
          %321 = dma.vmem_to_hbm [thread:$0]  %s317, 128, %s319, %s303
        $region40: #{tpu_custom_call.1} parent=35 // pred_fallthru
          _
      $region36: #{tpu_custom_call.1} parent=5 // pred_fallthru
        _
      %p322 = scmp.le.s32.totalorder 2, %s13
      // Predicated region
      $region41: #{tpu_custom_call.1} parent=5 // pred_check
        %p323 = pneg %p322
      $region42: #{tpu_custom_call.1} parent=5 // pred_check_branch
        %325 = sbr.rel (%p323) target = $region44
      $region43: #{tpu_custom_call.1} parent=5 // pred_region
        %s326 = ssub.s32 %s13, 2
        // Predicated region
        $region45: #{tpu_custom_call.1} parent=43 // pred_check
          %p327 = pneg %p155
        $region46: #{tpu_custom_call.1} parent=43 // pred_check_branch
          %329 = sbr.rel (%p327) target = $region48
        $region47: #{tpu_custom_call.1} parent=43 // pred_region
          %s330 = sand.u32 %s140, 1
          %s331 = scalar_lea.sflag [#allocation3], %s330
          %s332 = sand.u32 %s140, 1
          %s333 = smul.addr %s332, 8
          %s334 = scalar_lea.vmem [#allocation2], %s333
          %336 = dma.done %s331, 128
        $region48: #{tpu_custom_call.1} parent=43 // pred_fallthru
          _
      $region44: #{tpu_custom_call.1} parent=5 // pred_fallthru
        _
    $region6: #{tpu_custom_call.1} parent=1 // loop_footer
      %s17 = sadd.s32 1, %s13
    $region7: #{tpu_custom_call.1} parent=1 // loop_footer_branch
      %12 = sbr.rel target = $region3
    $region8: #{tpu_custom_call.1} parent=1 // loop_exit
      _
    %337 = vsyncpa [#allocation3], 1
    %s338 = scalar_lea.sflag [#allocation3], 1
    %339 = vsyncpa %s338, 1

</llo_original>
